<compile_context>
chip_gen: v5e
topology: v5e:2x2
jax: 0.10.0
libtpu: 0.0.40
codegen_flags: <defaults>
</compile_context>

<pallas_src>
import functools

import jax
import jax.numpy as jnp
from jax.experimental import pallas as pl
from jax.experimental.pallas import tpu as pltpu


def _mlp_kernel(x_ref, w1_ref, b1_ref, w2_ref, b2_ref, w3_ref, b3_ref, o_ref,
                *, compute_dtype):
    # x_ref: (5, TN) -- batch on the lane axis.
    xt = x_ref[...].astype(compute_dtype)

    # Layer 1: (32, 5) @ (5, TN) + (32, 1).  Sigmoid affine already folded into
    # w1/b1, so only tanh remains (EUP).
    z1 = jnp.dot(w1_ref[...], xt, preferred_element_type=jnp.float32) + b1_ref[...]
    t1 = jnp.tanh(z1.astype(compute_dtype))                     # (32, TN)

    # Layer 2: (64, 32) @ (32, TN) + (64, 1), tanh only.
    z2 = jnp.dot(w2_ref[...], t1, preferred_element_type=jnp.float32) + b2_ref[...]
    t2 = jnp.tanh(z2.astype(compute_dtype))                     # (64, TN)

    # Layer 3 (64 -> 1) on the MXU: (1, 64) @ (64, TN) + (1, 1),
    # fused with LeakyReLU (slope 0.01) on the VPU.
    z3 = jnp.dot(w3_ref[...], t2, preferred_element_type=jnp.float32) + b3_ref[...]
    o_ref[...] = jnp.where(z3 >= 0.0, z3, 0.01 * z3).astype(o_ref.dtype)


def _round_up(a, b):
    return ((a + b - 1) // b) * b


def _choose_tile(n, tile_n):
    """Lane-tile size: multiple of 128, capped near n, and split so the grid has
    >= 2 steps when there is enough work (feeds both TensorCores on v7x)."""
    n128 = _round_up(n, 128)
    tile = min(tile_n, n128)
    if n128 > 128 and pl.cdiv(n, tile) < 2:
        tile = max(128, _round_up(tile // 2, 128))
    return tile


def _fold_params(params, compute_dtype):
    """Fold sigmoid(z) = 0.5*tanh(0.5*z) + 0.5 into the constant weights/biases.

      t1 = tanh(0.5*W1^T x + 0.5*b1)
      t2 = tanh(0.25*W2^T t1 + (0.25*W2^T.1 + 0.5*b2))
      y  = leaky_relu(0.5*W3^T t2 + (0.5*sum(W3) + b3))
    Exact in real arithmetic; only ulp-level float drift.
    """
    w1, b1 = params["w1"], params["b1"]   # (5, 32), (32,)
    w2, b2 = params["w2"], params["b2"]   # (32, 64), (64,)
    w3, b3 = params["w3"], params["b3"]   # (64, 1), (1,)

    w1f = (0.5 * w1.T).astype(compute_dtype)                               # (32, 5)
    b1f = (0.5 * b1).reshape(-1, 1).astype(jnp.float32)                    # (32, 1)
    w2f = (0.25 * w2.T).astype(compute_dtype)                              # (64, 32)
    b2f = (0.25 * jnp.sum(w2, axis=0) + 0.5 * b2).reshape(-1, 1).astype(jnp.float32)
    w3f = (0.5 * w3.T).astype(compute_dtype)                               # (1, 64)
    b3f = (0.5 * jnp.sum(w3) + b3).reshape(1, 1).astype(jnp.float32)       # (1, 1)
    return w1f, b1f, w2f, b2f, w3f, b3f


def fit_model_forward(x, params, *, tile_n=4096, feature_major=False,
                      bf16_activations=False):
    """Forward pass of Fit_model.

    x: (N, 5) float32, or (5, N) if feature_major=True (avoids a standalone
       HBM transpose copy in the wrapper).
    params: w1 (5,32), b1 (32,), w2 (32,64), b2 (64,), w3 (64,1), b3 (1,).
    bf16_activations: bf16 weights/activations with f32 accumulation
       (recommended on v6e/v7x only; keep False on v5e / for exact checks).
    Returns (N, 1) float32, matching the PyTorch forward.
    """
    compute_dtype = jnp.bfloat16 if bf16_activations else jnp.float32

    if feature_major:
        xt = x                                        # already (5, N)
    else:
        # TODO(synk): if the producer can emit x feature-major (5, N), pass
        # feature_major=True to skip this standalone transpose copy (it is the
        # dominant HBM cost at large N).
        xt = x.T
    n = xt.shape[1]

    w1f, b1f, w2f, b2f, w3f, b3f = _fold_params(params, compute_dtype)

    tile = _choose_tile(n, tile_n)
    grid = (pl.cdiv(n, tile),)                        # ragged last tile handled by Pallas

    resident = lambda a: pl.BlockSpec(a.shape, lambda i: (0, 0))  # stays in VMEM

    cost = pl.CostEstimate(
        flops=2 * n * (5 * 32 + 32 * 64 + 64 * 1),
        transcendentals=n * (32 + 64),
        bytes_accessed=4 * n * (5 + 1) + 4 * (5 * 32 + 32 + 32 * 64 + 64 + 64 + 1),
    )

    out = pl.pallas_call(
        functools.partial(_mlp_kernel, compute_dtype=compute_dtype),
        out_shape=jax.ShapeDtypeStruct((1, n), jnp.float32),
        grid=grid,
        in_specs=[
            pl.BlockSpec((5, tile), lambda i: (0, i)),   # x tile, batch on lanes
            resident(w1f), resident(b1f),
            resident(w2f), resident(b2f),
            resident(w3f), resident(b3f),
        ],
        out_specs=pl.BlockSpec((1, tile), lambda i: (0, i)),
        compiler_params=pltpu.CompilerParams(
            dimension_semantics=("parallel",)),
        cost_estimate=cost,
    )(xt, w1f, b1f, w2f, b2f, w3f, b3f)

    return out.T  # (N, 1)


def init_params(key):
    """PyTorch-style uniform(-1/sqrt(in), 1/sqrt(in)) init.

    Weights stored as (in, out) so the pure-JAX reference is x @ W + b."""
    dims = [(5, 32), (32, 64), (64, 1)]
    params = {}
    keys = jax.random.split(key, 2 * len(dims))
    for i, (din, dout) in enumerate(dims):
        bound = 1.0 / jnp.sqrt(jnp.float32(din))
        params[f"w{i + 1}"] = jax.random.uniform(
            keys[2 * i], (din, dout), jnp.float32, minval=-bound, maxval=bound)
        params[f"b{i + 1}"] = jax.random.uniform(
            keys[2 * i + 1], (dout,), jnp.float32, minval=-bound, maxval=bound)
    return params


if __name__ == "__main__":
    key = jax.random.PRNGKey(0)
    pkey, xkey1, xkey2 = jax.random.split(key, 3)

    params = init_params(pkey)

    # Pure-JAX reference of the same forward pass (PyTorch orientation).
    def ref(x, p):
        h = jax.nn.sigmoid(x @ p["w1"] + p["b1"])
        h = jax.nn.sigmoid(h @ p["w2"] + p["b2"])
        h = h @ p["w3"] + p["b3"]
        return jnp.where(h >= 0.0, h, 0.01 * h)

    # Small batch: single (partial) lane tile.
    x_small = jax.random.normal(xkey1, (8, 5), dtype=jnp.float32)
    y_small = fit_model_forward(x_small, params)
    jax.block_until_ready(y_small)
    assert y_small.shape == (8, 1)
    assert jnp.allclose(y_small, ref(x_small, params), atol=2e-5, rtol=1e-5)

    # Larger batch: exercises a multi-step grid with a ragged last tile.
    x_big = jax.random.normal(xkey2, (300, 5), dtype=jnp.float32)
    y_big = fit_model_forward(x_big, params)
    jax.block_until_ready(y_big)
    assert y_big.shape == (300, 1)
    assert jnp.allclose(y_big, ref(x_big, params), atol=2e-5, rtol=1e-5)

    print("KERNEL_OK")
</pallas_src>

<mosaic_0001>
module attributes {stable_mosaic.version = 11 : i64} {
  func.func @_mlp_kernel(%arg0: i32, %arg1: memref<5x128xf32, #tpu.memory_space<vmem>>, %arg2: memref<32x5xf32, #tpu.memory_space<vmem>>, %arg3: memref<32x1xf32, #tpu.memory_space<vmem>>, %arg4: memref<64x32xf32, #tpu.memory_space<vmem>>, %arg5: memref<64x1xf32, #tpu.memory_space<vmem>>, %arg6: memref<1x64xf32, #tpu.memory_space<vmem>>, %arg7: memref<1x1xf32, #tpu.memory_space<vmem>>, %arg8: memref<1x128xf32, #tpu.memory_space<vmem>>) attributes {dimension_semantics = [#tpu.dimension_semantics<parallel>], iteration_bounds = array<i64: 1>, scalar_prefetch = 0 : i64, scratch_operands = 0 : i64, tpu.core_type = #tpu.core_type<tc>, window_params = [{transform_indices = @transform_0, window_bounds = array<i64: 5, 128>}, {pipeline_mode = #tpu.pipeline_mode<synchronous>, transform_indices = @transform_1, window_bounds = array<i64: 32, 5>}, {pipeline_mode = #tpu.pipeline_mode<synchronous>, transform_indices = @transform_2, window_bounds = array<i64: 32, 1>}, {pipeline_mode = #tpu.pipeline_mode<synchronous>, transform_indices = @transform_3, window_bounds = array<i64: 64, 32>}, {pipeline_mode = #tpu.pipeline_mode<synchronous>, transform_indices = @transform_4, window_bounds = array<i64: 64, 1>}, {pipeline_mode = #tpu.pipeline_mode<synchronous>, transform_indices = @transform_5, window_bounds = array<i64: 1, 64>}, {pipeline_mode = #tpu.pipeline_mode<synchronous>, transform_indices = @transform_6, window_bounds = array<i64: 1, 1>}, {transform_indices = @transform_7, window_bounds = array<i64: 1, 128>}]} {
    %c0 = arith.constant 0 : index
    %c0_0 = arith.constant 0 : index
    %0 = vector.load %arg1[%c0, %c0_0] : memref<5x128xf32, #tpu.memory_space<vmem>>, vector<5x128xf32>
    %c0_1 = arith.constant 0 : index
    %c0_2 = arith.constant 0 : index
    %1 = vector.load %arg2[%c0_1, %c0_2] : memref<32x5xf32, #tpu.memory_space<vmem>>, vector<32x5xf32>
    %cst = arith.constant dense<0.000000e+00> : vector<32x128xf32>
    %2 = tpu.matmul %1, %0, %cst {dimension_numbers = #tpu.dot_dimension_numbers<[1], [0], [0], [1], [0, 0, 1, 1], [], []>} : vector<32x5xf32>, vector<5x128xf32>, vector<32x128xf32> -> vector<32x128xf32>
    %c0_3 = arith.constant 0 : index
    %c0_4 = arith.constant 0 : index
    %3 = vector.load %arg3[%c0_3, %c0_4] : memref<32x1xf32, #tpu.memory_space<vmem>>, vector<32x1xf32>
    %4 = vector.broadcast %3 : vector<32x1xf32> to vector<32x128xf32>
    %5 = arith.addf %2, %4 : vector<32x128xf32>
    %6 = math.tanh %5 : vector<32x128xf32>
    %c0_5 = arith.constant 0 : index
    %c0_6 = arith.constant 0 : index
    %7 = vector.load %arg4[%c0_5, %c0_6] : memref<64x32xf32, #tpu.memory_space<vmem>>, vector<64x32xf32>
    %cst_7 = arith.constant dense<0.000000e+00> : vector<64x128xf32>
    %8 = tpu.matmul %7, %6, %cst_7 {dimension_numbers = #tpu.dot_dimension_numbers<[1], [0], [0], [1], [0, 0, 1, 1], [], []>} : vector<64x32xf32>, vector<32x128xf32>, vector<64x128xf32> -> vector<64x128xf32>
    %c0_8 = arith.constant 0 : index
    %c0_9 = arith.constant 0 : index
    %9 = vector.load %arg5[%c0_8, %c0_9] : memref<64x1xf32, #tpu.memory_space<vmem>>, vector<64x1xf32>
    %10 = vector.broadcast %9 : vector<64x1xf32> to vector<64x128xf32>
    %11 = arith.addf %8, %10 : vector<64x128xf32>
    %12 = math.tanh %11 : vector<64x128xf32>
    %c0_10 = arith.constant 0 : index
    %c0_11 = arith.constant 0 : index
    %13 = vector.load %arg6[%c0_10, %c0_11] : memref<1x64xf32, #tpu.memory_space<vmem>>, vector<1x64xf32>
    %cst_12 = arith.constant dense<0.000000e+00> : vector<1x128xf32>
    %14 = tpu.matmul %13, %12, %cst_12 {dimension_numbers = #tpu.dot_dimension_numbers<[1], [0], [0], [1], [0, 0, 1, 1], [], []>} : vector<1x64xf32>, vector<64x128xf32>, vector<1x128xf32> -> vector<1x128xf32>
    %c0_13 = arith.constant 0 : index
    %c0_14 = arith.constant 0 : index
    %15 = vector.load %arg7[%c0_13, %c0_14] : memref<1x1xf32, #tpu.memory_space<vmem>>, vector<1x1xf32>
    %16 = vector.broadcast %15 : vector<1x1xf32> to vector<1x128xf32>
    %17 = arith.addf %14, %16 : vector<1x128xf32>
    %cst_15 = arith.constant 0.000000e+00 : f32
    %18 = vector.broadcast %cst_15 : f32 to vector<1x128xf32>
    %19 = arith.cmpf oge, %17, %18 : vector<1x128xf32>
    %cst_16 = arith.constant 0.00999999977 : f32
    %20 = vector.broadcast %cst_16 : f32 to vector<1x128xf32>
    %21 = arith.mulf %20, %17 : vector<1x128xf32>
    %22 = arith.select %19, %17, %21 : vector<1x128xi1>, vector<1x128xf32>
    %c0_17 = arith.constant 0 : index
    %c0_18 = arith.constant 0 : index
    %23 = vector.load %arg8[%c0_17, %c0_18] : memref<1x128xf32, #tpu.memory_space<vmem>>, vector<1x128xf32>
    tpu.vector_store %arg8[%c0_17, %c0_18], %22 {strides = array<i32>} : memref<1x128xf32, #tpu.memory_space<vmem>>, vector<1x128xf32>,
    return
  }
  func.func @transform_0(%arg0: i32) -> (i32, i32) {
    %c0_i32 = arith.constant 0 : i32
    %c0_i32_0 = arith.constant 0 : i32
    return %c0_i32, %arg0 : i32, i32
  }
  func.func @transform_1(%arg0: i32) -> (i32, i32) {
    %c0_i32 = arith.constant 0 : i32
    %c0_i32_0 = arith.constant 0 : i32
    %c0_i32_1 = arith.constant 0 : i32
    return %c0_i32, %c0_i32_0 : i32, i32
  }
  func.func @transform_2(%arg0: i32) -> (i32, i32) {
    %c0_i32 = arith.constant 0 : i32
    %c0_i32_0 = arith.constant 0 : i32
    %c0_i32_1 = arith.constant 0 : i32
    return %c0_i32, %c0_i32_0 : i32, i32
  }
  func.func @transform_3(%arg0: i32) -> (i32, i32) {
    %c0_i32 = arith.constant 0 : i32
    %c0_i32_0 = arith.constant 0 : i32
    %c0_i32_1 = arith.constant 0 : i32
    return %c0_i32, %c0_i32_0 : i32, i32
  }
  func.func @transform_4(%arg0: i32) -> (i32, i32) {
    %c0_i32 = arith.constant 0 : i32
    %c0_i32_0 = arith.constant 0 : i32
    %c0_i32_1 = arith.constant 0 : i32
    return %c0_i32, %c0_i32_0 : i32, i32
  }
  func.func @transform_5(%arg0: i32) -> (i32, i32) {
    %c0_i32 = arith.constant 0 : i32
    %c0_i32_0 = arith.constant 0 : i32
    %c0_i32_1 = arith.constant 0 : i32
    return %c0_i32, %c0_i32_0 : i32, i32
  }
  func.func @transform_6(%arg0: i32) -> (i32, i32) {
    %c0_i32 = arith.constant 0 : i32
    %c0_i32_0 = arith.constant 0 : i32
    %c0_i32_1 = arith.constant 0 : i32
    return %c0_i32, %c0_i32_0 : i32, i32
  }
  func.func @transform_7(%arg0: i32) -> (i32, i32) {
    %c0_i32 = arith.constant 0 : i32
    %c0_i32_0 = arith.constant 0 : i32
    return %c0_i32, %arg0 : i32, i32
  }
}

</mosaic_0001>

<llo_original>
// kernel: tpu_custom_call.1
$region0: #{tpu_custom_call.1}
  #allocation0 [shape = 'u32[]', space=smem, size = 0x4, offset = 0x4, fixed_abs, tag = 'smem constant byte address 0x4 - core index']
  #allocation1 [shape = 'u32[72,128]{1,0:T(1,128)}', space=vmem, size = 0x9000, scoped, tag = 'internal scratch']
  #allocation2 [shape = 'f32[1,1]{1,0:T(1,128)S(1)}', space=vmem, size = 0x200, scoped, tag = 'scoped memory for tpu_custom_call.1']
  %s0 = inlined_call_operand.vmem [shape: f32[5,8], index: 0, kind: input, shape index: {}]
  %s1 = inlined_call_operand.vmem [shape: f32[32,5], index: 1, kind: input, shape index: {}]
  %s2 = inlined_call_operand.vmem [shape: f32[32,1], index: 2, kind: input, shape index: {}]
  %s3 = inlined_call_operand.vmem [shape: f32[64,32], index: 3, kind: input, shape index: {}]
  %s4 = inlined_call_operand.vmem [shape: f32[64,1], index: 4, kind: input, shape index: {}]
  %s5 = inlined_call_operand.vmem [shape: f32[1,64], index: 5, kind: input, shape index: {}]
  %s6 = inlined_call_operand.<no memory space> [shape: f32[1,1], index: 6, kind: input, shape index: {}]
  %s7 = inlined_call_operand.hbm [shape: f32[1,8], index: 7, kind: output, shape index: {}]
  %s8 = sld [smem:[#allocation0]]
  $region38: #{tpu_custom_call.1} parent=0
    _
  %s10 = ssub.s32 1, %s8
  %s11 = scalar_select 0, %s10, %s8
  %v12 = vstv %s6
  %13 = vst [vmem:[#allocation2] sm:$0x1] %v12
  $region1: #{tpu_custom_call.1} parent=0
    #allocation3 [shape = 'u8[512]{0}', space=vmem, size = 0x400, scoped, tag = 'output window, operand 0, single buffered']
    #allocation4 [shape = 's32[1]{0}', space=sflag, size = 0x4, scoped, tag = 'scoped memory for tpu_custom_call.1']
    %14 = vsyncpa [#allocation4], 0
    // Predicated region
    $region2: #{tpu_custom_call.1} parent=1 // pred_check
      _
    $region3: #{tpu_custom_call.1} parent=1 // pred_check_branch
      %16 = sbr.rel (0) target = $region5
    $region4: #{tpu_custom_call.1} parent=1 // pred_region
      _
    $region5: #{tpu_custom_call.1} parent=1 // pred_fallthru
      _
    // Predicated region
    $region6: #{tpu_custom_call.1} parent=1 // pred_check
      _
    $region7: #{tpu_custom_call.1} parent=1 // pred_check_branch
      %18 = sbr.rel (0) target = $region9
    $region8: #{tpu_custom_call.1} parent=1 // pred_region
      _
    $region9: #{tpu_custom_call.1} parent=1 // pred_fallthru
      _
    // Predicated region
    $region10: #{tpu_custom_call.1} parent=1 // pred_check
      _
    $region11: #{tpu_custom_call.1} parent=1 // pred_check_branch
      %20 = sbr.rel (0) target = $region13
    $region12: #{tpu_custom_call.1} parent=1 // pred_region
      _
    $region13: #{tpu_custom_call.1} parent=1 // pred_fallthru
      _
    // Predicated region
    $region14: #{tpu_custom_call.1} parent=1 // pred_check
      _
    $region15: #{tpu_custom_call.1} parent=1 // pred_check_branch
      %22 = sbr.rel (0) target = $region17
    $region16: #{tpu_custom_call.1} parent=1 // pred_region
      _
    $region17: #{tpu_custom_call.1} parent=1 // pred_fallthru
      _
    // Predicated region
    $region18: #{tpu_custom_call.1} parent=1 // pred_check
      _
    $region19: #{tpu_custom_call.1} parent=1 // pred_check_branch
      %24 = sbr.rel (0) target = $region21
    $region20: #{tpu_custom_call.1} parent=1 // pred_region
      _
    $region21: #{tpu_custom_call.1} parent=1 // pred_fallthru
      _
    // Predicated region
    $region22: #{tpu_custom_call.1} parent=1 // pred_check
      _
    $region23: #{tpu_custom_call.1} parent=1 // pred_check_branch
      %26 = sbr.rel (0) target = $region25
    $region24: #{tpu_custom_call.1} parent=1 // pred_region
      _
    $region25: #{tpu_custom_call.1} parent=1 // pred_fallthru
      _
    // Predicated region
    $region26: #{tpu_custom_call.1} parent=1 // pred_check
      _
    $region27: #{tpu_custom_call.1} parent=1 // pred_check_branch
      %28 = sbr.rel (0) target = $region29
    $region28: #{tpu_custom_call.1} parent=1 // pred_region
      _
    $region29: #{tpu_custom_call.1} parent=1 // pred_fallthru
      _
    %v29 = vld [vmem:[%s0] sm:$0x1f]
    %v30 = vld [vmem:[%s1] sm:$0xff]
    %v31 = vld [vmem:[%s1 + $0x8] sm:$0xff]
    %v32 = vld [vmem:[%s1 + $0x10] sm:$0xff]
    %v33 = vld [vmem:[%s1 + $0x18] sm:$0xff]
    %v34 = vld [vmem:[%s2] sm:$0xff]
    %v35 = vld [vmem:[%s2 + $0x8] sm:$0xff]
    %v36 = vld [vmem:[%s2 + $0x10] sm:$0xff]
    %v37 = vld [vmem:[%s2 + $0x18] sm:$0xff]
    %39 = vset.pattern.permute.xlu0 0
    %40 = vperm.xlu0 %39, %v34
    %v41 = vpop.permute.xlu0 %40
    %44 = vset.pattern.permute.xlu0 0
    %45 = vperm.xlu0 %44, %v35
    %v46 = vpop.permute.xlu0 %45
    %49 = vset.pattern.permute.xlu0 0
    %50 = vperm.xlu0 %49, %v36
    %v51 = vpop.permute.xlu0 %50
    %54 = vset.pattern.permute.xlu0 0
    %55 = vperm.xlu0 %54, %v37
    %v56 = vpop.permute.xlu0 %55
    %vm58 = vcmask 39936
    %v60 = vsel %vm58, %v30, 0
    %v63 = vsel %vm58, %v31, 0
    %v66 = vsel %vm58, %v32, 0
    %v69 = vsel %vm58, %v33, 0
    %vm71 = vcmask 1044480
    %v73 = vsel %vm71, %v29, 0
    %75 = vmatpush.msra.mxu0 0.0
    %76 = vmatpush.msra.mxu0 0.0
    %77 = vmatpush.msra.mxu0 0.0
    %78 = vmatpush.msra.mxu0 0.0
    %79 = vmatpush.msra.mxu0 0.0
    %80 = vmatpush.msra.mxu0 0.0
    %81 = vmatpush.msra.mxu0 0.0
    %82 = vmatpush.msra.mxu0 0.0
    %83 = vmatpush.msra.mxu0 0.0
    %84 = vmatpush.msra.mxu0 0.0
    %85 = vmatpush.msra.mxu0 0.0
    %86 = vmatpush.msra.mxu0 0.0
    %87 = vmatpush.msra.mxu0 0.0
    %88 = vmatpush.msra.mxu0 0.0
    %89 = vmatpush.msra.mxu0 0.0
    %90 = vmatpush.msra.mxu0 %v73
    %91 = vmatmul.f32.gmra.mxu0 %v60
    %v92 = vpop.f32.mrf.mxu0
    %v93 = vadd.f32 %v41, %v92
    %94 = vmatmul.f32.gmra.mxu0 %v63
    %v95 = vpop.f32.mrf.mxu0
    %v96 = vadd.f32 %v46, %v95
    %97 = vmatmul.f32.gmra.mxu0 %v66
    %v98 = vpop.f32.mrf.mxu0
    %v99 = vadd.f32 %v51, %v98
    %100 = vmatmul.f32.gmra.mxu0 %v69
    %v101 = vpop.f32.mrf.mxu0
    %v102 = vadd.f32 %v56, %v101
    %103 = vdwg.mxu0
    %v104 = vtanh.pop %v93
    %v105 = vtanh.pop %v96
    %v106 = vtanh.pop %v99
    %v107 = vtanh.pop %v102
    %v108 = vld [vmem:[%s3] sm:$0xff]
    %v109 = vld [vmem:[%s3 + $0x8] sm:$0xff]
    %v110 = vld [vmem:[%s3 + $0x10] sm:$0xff]
    %v111 = vld [vmem:[%s3 + $0x18] sm:$0xff]
    %v112 = vld [vmem:[%s3 + $0x20] sm:$0xff]
    %v113 = vld [vmem:[%s3 + $0x28] sm:$0xff]
    %v114 = vld [vmem:[%s3 + $0x30] sm:$0xff]
    %v115 = vld [vmem:[%s3 + $0x38] sm:$0xff]
    %v116 = vld [vmem:[%s4] sm:$0xff]
    %v117 = vld [vmem:[%s4 + $0x8] sm:$0xff]
    %v118 = vld [vmem:[%s4 + $0x10] sm:$0xff]
    %v119 = vld [vmem:[%s4 + $0x18] sm:$0xff]
    %v120 = vld [vmem:[%s4 + $0x20] sm:$0xff]
    %v121 = vld [vmem:[%s4 + $0x28] sm:$0xff]
    %v122 = vld [vmem:[%s4 + $0x30] sm:$0xff]
    %v123 = vld [vmem:[%s4 + $0x38] sm:$0xff]
    %125 = vset.pattern.permute.xlu0 0
    %126 = vperm.xlu0 %125, %v116
    %v127 = vpop.permute.xlu0 %126
    %130 = vset.pattern.permute.xlu0 0
    %131 = vperm.xlu0 %130, %v117
    %v132 = vpop.permute.xlu0 %131
    %135 = vset.pattern.permute.xlu0 0
    %136 = vperm.xlu0 %135, %v118
    %v137 = vpop.permute.xlu0 %136
    %140 = vset.pattern.permute.xlu0 0
    %141 = vperm.xlu0 %140, %v119
    %v142 = vpop.permute.xlu0 %141
    %145 = vset.pattern.permute.xlu0 0
    %146 = vperm.xlu0 %145, %v120
    %v147 = vpop.permute.xlu0 %146
    %150 = vset.pattern.permute.xlu0 0
    %151 = vperm.xlu0 %150, %v121
    %v152 = vpop.permute.xlu0 %151
    %155 = vset.pattern.permute.xlu0 0
    %156 = vperm.xlu0 %155, %v122
    %v157 = vpop.permute.xlu0 %156
    %160 = vset.pattern.permute.xlu0 0
    %161 = vperm.xlu0 %160, %v123
    %v162 = vpop.permute.xlu0 %161
    %vm164 = vcmask 261120
    %v166 = vsel %vm164, %v108, 0
    %v169 = vsel %vm164, %v109, 0
    %v172 = vsel %vm164, %v110, 0
    %v175 = vsel %vm164, %v111, 0
    %v178 = vsel %vm164, %v112, 0
    %v181 = vsel %vm164, %v113, 0
    %v184 = vsel %vm164, %v114, 0
    %v187 = vsel %vm164, %v115, 0
    %189 = vmatpush.msra.mxu0 0.0
    %190 = vmatpush.msra.mxu0 0.0
    %191 = vmatpush.msra.mxu0 0.0
    %192 = vmatpush.msra.mxu0 0.0
    %193 = vmatpush.msra.mxu0 0.0
    %194 = vmatpush.msra.mxu0 0.0
    %195 = vmatpush.msra.mxu0 0.0
    %196 = vmatpush.msra.mxu0 0.0
    %197 = vmatpush.msra.mxu0 0.0
    %198 = vmatpush.msra.mxu0 0.0
    %199 = vmatpush.msra.mxu0 0.0
    %200 = vmatpush.msra.mxu0 0.0
    %201 = vmatpush.msra.mxu0 %v107
    %202 = vmatpush.msra.mxu0 %v106
    %203 = vmatpush.msra.mxu0 %v105
    %204 = vmatpush.msra.mxu0 %v104
    %205 = vmatmul.f32.gmra.mxu0 %v166
    %v206 = vpop.f32.mrf.mxu0
    %v207 = vadd.f32 %v127, %v206
    %208 = vmatmul.f32.gmra.mxu0 %v169
    %v209 = vpop.f32.mrf.mxu0
    %v210 = vadd.f32 %v132, %v209
    %211 = vmatmul.f32.gmra.mxu0 %v172
    %v212 = vpop.f32.mrf.mxu0
    %v213 = vadd.f32 %v137, %v212
    %214 = vmatmul.f32.gmra.mxu0 %v175
    %v215 = vpop.f32.mrf.mxu0
    %v216 = vadd.f32 %v142, %v215
    %217 = vmatmul.f32.gmra.mxu0 %v178
    %v218 = vpop.f32.mrf.mxu0
    %v219 = vadd.f32 %v147, %v218
    %220 = vmatmul.f32.gmra.mxu0 %v181
    %v221 = vpop.f32.mrf.mxu0
    %v222 = vadd.f32 %v152, %v221
    %223 = vmatmul.f32.gmra.mxu0 %v184
    %v224 = vpop.f32.mrf.mxu0
    %v225 = vadd.f32 %v157, %v224
    %226 = vmatmul.f32.gmra.mxu0 %v187
    %v227 = vpop.f32.mrf.mxu0
    %v228 = vadd.f32 %v162, %v227
    %229 = vdwg.mxu0
    %v230 = vtanh.pop %v207
    %v231 = vtanh.pop %v210
    %v232 = vtanh.pop %v213
    %v233 = vtanh.pop %v216
    %v234 = vtanh.pop %v219
    %v235 = vtanh.pop %v222
    %v236 = vtanh.pop %v225
    %v237 = vtanh.pop %v228
    %v238 = vld [vmem:[%s5] sm:$0x1]
    %v239 = vld [vmem:[#allocation2] sm:$0x1]
    %241 = vset.pattern.permute.xlu0 0
    %242 = vperm.xlu0 %241, %v239
    %v243 = vpop.permute.xlu0 %242
    %v245 = vperm.slane %v243, 0
    %vm246 = vcmask 523264
    %v248 = vsel %vm246, %v238, 0
    %250 = vmatpush.msra.mxu0 0.0
    %251 = vmatpush.msra.mxu0 0.0
    %252 = vmatpush.msra.mxu0 0.0
    %253 = vmatpush.msra.mxu0 0.0
    %254 = vmatpush.msra.mxu0 0.0
    %255 = vmatpush.msra.mxu0 0.0
    %256 = vmatpush.msra.mxu0 0.0
    %257 = vmatpush.msra.mxu0 0.0
    %258 = vmatpush.msra.mxu0 %v237
    %259 = vmatpush.msra.mxu0 %v236
    %260 = vmatpush.msra.mxu0 %v235
    %261 = vmatpush.msra.mxu0 %v234
    %262 = vmatpush.msra.mxu0 %v233
    %263 = vmatpush.msra.mxu0 %v232
    %264 = vmatpush.msra.mxu0 %v231
    %265 = vmatpush.msra.mxu0 %v230
    %266 = vmatmul.f32.gmra.mxu0 %v248
    %v267 = vpop.f32.mrf.mxu0
    %v268 = vadd.f32 %v245, %v267
    %269 = vdwg.mxu0
    %vm270 = vcmp.ge.f32.partialorder %v268, 0.0
    %v271 = vmul.f32 %v268, 0.01
    %v272 = vsel %vm270, %v268, %v271
    %273 = vst [vmem:[#allocation3] sm:$0x1] %v272
    // Predicated region
    $region30: #{tpu_custom_call.1} parent=1 // pred_check
      _
    $region31: #{tpu_custom_call.1} parent=1 // pred_check_branch
      %275 = sbr.rel (0) target = $region33
    $region32: #{tpu_custom_call.1} parent=1 // pred_region
      %277 = vsyncadd [#allocation4], 0
      %s279 = sshll.u32 [#allocation3], 4
      %s280 = int_to_ptr.vmem [resolvable:$true] %s279
      %s281 = sshll.u32 %s7, 4
      %s282 = int_to_ptr.hbm [resolvable:$true] %s281
      %284 = dma.vmem_to_hbm [thread:$0]  %s280, 16, %s282, [#allocation4]
    $region33: #{tpu_custom_call.1} parent=1 // pred_fallthru
      _
    // Predicated region
    $region34: #{tpu_custom_call.1} parent=1 // pred_check
      _
    $region35: #{tpu_custom_call.1} parent=1 // pred_check_branch
      %286 = sbr.rel (0) target = $region37
    $region36: #{tpu_custom_call.1} parent=1 // pred_region
      %288 = dma.done [#allocation4], 16
    $region37: #{tpu_custom_call.1} parent=1 // pred_fallthru
      _
    %289 = vsyncpa [#allocation4], 1

</llo_original>
